<compile_context>
chip_gen: v6e
topology: v6e:2x2x1
jax: 0.10.0
libtpu: 0.0.40
codegen_flags: <defaults>
</compile_context>

<pallas_src>
import jax
import jax.numpy as jnp
from jax import lax
from jax.experimental import pallas as pl
from jax.experimental.pallas import tpu as pltpu


# ---------------------------------------------------------------------------
# Tiling helper: row tiles near `target_bytes`, multiple of 8 sublanes, whole
# array when it fits in one block.
# ---------------------------------------------------------------------------
def _row_tile(m: int, row_bytes: int, target_bytes: int = 4 << 20) -> int:
    if m <= 8:
        return m
    t = min(m, max(8, target_bytes // max(row_bytes, 1)))
    if t >= m:
        return m
    return max(8, (t // 8) * 8)


def _permute_gate_cols(w):
    """Permute the trailing 4H gate axis from PyTorch [i, f, g, o] to [i, f, o, g]
    so the kernel applies sigmoid to one contiguous [:, :3H] slice."""
    h = w.shape[-1] // 4
    return jnp.concatenate([w[..., :2 * h], w[..., 3 * h:], w[..., 2 * h:3 * h]], axis=-1)


# ---------------------------------------------------------------------------
# Kernels
# ---------------------------------------------------------------------------
def _embed_proj_kernel(x1_ref, x2_ref, wp_ref, gp_ref, b_ref, o_ref):
    """x_proj0 = Wp[x1] + Gp[x2] + b  via one-hot MXU gathers (small vocab).
    Out-of-range / edge-padding ids map to an all-zero row; those rows are only
    ever produced for out-of-bounds output rows that are dropped on writeback."""
    tm = x1_ref.shape[0]
    vw = wp_ref.shape[0]
    vg = gp_ref.shape[0]
    oh_w = (lax.broadcasted_iota(jnp.int32, (tm, vw), 1) == x1_ref[...]).astype(jnp.float32)
    oh_g = (lax.broadcasted_iota(jnp.int32, (tm, vg), 1) == x2_ref[...]).astype(jnp.float32)
    acc = jnp.dot(oh_w, wp_ref[...], preferred_element_type=jnp.float32)
    acc = acc + jnp.dot(oh_g, gp_ref[...], preferred_element_type=jnp.float32)
    o_ref[...] = (acc + b_ref[...]).astype(o_ref.dtype)


def _matmul_bias_kernel(x_ref, w_ref, b_ref, o_ref):
    acc = jnp.dot(x_ref[...], w_ref[...], preferred_element_type=jnp.float32)
    o_ref[...] = (acc + b_ref[...]).astype(o_ref.dtype)


def _lstm_kernel(len_ref, xproj_ref, whh_ref, h0_ref, c0_ref,
                 out_ref, hn_ref, cn_ref):
    """One time-CHUNK per grid step.  hn_ref/cn_ref (block index constant across
    the time axis) carry the recurrent state; inside the chunk an unrolled
    fori_loop keeps h/c in vregs.  Length masking reproduces packed-sequence
    semantics (state frozen and output zeroed once t >= length[b]); the same mask
    neutralizes edge-padded time steps."""
    ti = pl.program_id(1)
    tc = xproj_ref.shape[0]
    hid = h0_ref.shape[-1]

    @pl.when(ti == 0)
    def _init():
        hn_ref[...] = h0_ref[...]
        cn_ref[...] = c0_ref[...]

    lengths = len_ref[...]                     # (tb, 1) int32
    whh = whh_ref[...]

    def step(t, carry):
        h, c = carry
        gates = xproj_ref[t] + jnp.dot(h, whh, preferred_element_type=jnp.float32)
        sig = jax.nn.sigmoid(gates[:, :3 * hid])     # gates are [i, f, o, g]
        i_g = sig[:, 0 * hid:1 * hid]
        f_g = sig[:, 1 * hid:2 * hid]
        o_g = sig[:, 2 * hid:3 * hid]
        g_g = jnp.tanh(gates[:, 3 * hid:])
        c_new = f_g * c + i_g * g_g
        h_new = o_g * jnp.tanh(c_new)
        valid = (ti * tc + t) < lengths              # (tb, 1) packed-sequence mask
        h = jnp.where(valid, h_new, h)
        c = jnp.where(valid, c_new, c)
        out_ref[t] = jnp.where(valid, h_new, 0.0).astype(out_ref.dtype)
        return h, c

    h, c = lax.fori_loop(0, tc, step, (hn_ref[...], cn_ref[...]), unroll=True)
    hn_ref[...] = h
    cn_ref[...] = c


# ---------------------------------------------------------------------------
# Wrappers
# ---------------------------------------------------------------------------
def embed_proj(x1_flat, x2_flat, wp_table, gp_table, bias):
    n = x1_flat.shape[0]
    h4 = wp_table.shape[1]
    vw, vg = wp_table.shape[0], gp_table.shape[0]
    tm = _row_tile(n, max(h4, vw + vg) * 4)
    return pl.pallas_call(
        _embed_proj_kernel,
        out_shape=jax.ShapeDtypeStruct((n, h4), jnp.float32),
        grid=(pl.cdiv(n, tm),),
        in_specs=[
            pl.BlockSpec((tm, 1), lambda i: (i, 0)),
            pl.BlockSpec((tm, 1), lambda i: (i, 0)),
            pl.BlockSpec(wp_table.shape, lambda i: (0, 0)),
            pl.BlockSpec(gp_table.shape, lambda i: (0, 0)),
            pl.BlockSpec((1, h4), lambda i: (0, 0)),
        ],
        out_specs=pl.BlockSpec((tm, h4), lambda i: (i, 0)),
        compiler_params=pltpu.CompilerParams(
            dimension_semantics=("parallel",), vmem_limit_bytes=32 << 20),
    )(x1_flat[:, None], x2_flat[:, None], wp_table, gp_table, bias[None, :])


def matmul_bias(x, w_t, b):
    """out = x @ w_t + b with the output N dim padded to a 128-lane multiple
    (unmasked stores) and tiled so the weight block never has to hold a huge
    (K, n_out) slab resident (v7x's smaller VMEM)."""
    m, k = x.shape
    n = w_t.shape[1]
    n_pad = ((n + 127) // 128) * 128
    if n_pad != n:
        w_t = jnp.pad(w_t, ((0, 0), (0, n_pad - n)))
        b = jnp.pad(b, (0, n_pad - n))
    tm = _row_tile(m, max(k, n_pad) * 4)
    tn = min(n_pad, 512)
    out = pl.pallas_call(
        _matmul_bias_kernel,
        out_shape=jax.ShapeDtypeStruct((m, n_pad), jnp.float32),
        grid=(pl.cdiv(m, tm), pl.cdiv(n_pad, tn)),
        in_specs=[
            pl.BlockSpec((tm, k), lambda i, j: (i, 0)),
            pl.BlockSpec((k, tn), lambda i, j: (0, j)),
            pl.BlockSpec((1, tn), lambda i, j: (0, j)),
        ],
        out_specs=pl.BlockSpec((tm, tn), lambda i, j: (i, j)),
        compiler_params=pltpu.CompilerParams(
            dimension_semantics=("parallel", "parallel"), vmem_limit_bytes=32 << 20),
    )(x, w_t, b[None, :])
    return out[:, :n] if n_pad != n else out


def lstm_layer(x_proj, w_hh_t, h0, c0, lengths, *, time_chunk=4):
    s, b, h4 = x_proj.shape
    hid = h0.shape[-1]
    tc = min(time_chunk, s)
    # Batch tile: multiple of 8 when the batch is large enough to split across
    # grid steps (engages v7x's second TensorCore); otherwise whole batch.
    tb = 8 if (b >= 16 and b % 8 == 0) else b
    lengths2d = lengths.astype(jnp.int32).reshape(b, 1)
    return pl.pallas_call(
        _lstm_kernel,
        out_shape=(
            jax.ShapeDtypeStruct((s, b, hid), jnp.float32),
            jax.ShapeDtypeStruct((b, hid), jnp.float32),
            jax.ShapeDtypeStruct((b, hid), jnp.float32),
        ),
        grid=(pl.cdiv(b, tb), pl.cdiv(s, tc)),
        in_specs=[
            pl.BlockSpec((tb, 1), lambda bi, ti: (bi, 0)),
            pl.BlockSpec((tc, tb, h4), lambda bi, ti: (ti, bi, 0)),
            pl.BlockSpec((hid, h4), lambda bi, ti: (0, 0)),
            pl.BlockSpec((tb, hid), lambda bi, ti: (bi, 0)),
            pl.BlockSpec((tb, hid), lambda bi, ti: (bi, 0)),
        ],
        out_specs=(
            pl.BlockSpec((tc, tb, hid), lambda bi, ti: (ti, bi, 0)),
            pl.BlockSpec((tb, hid), lambda bi, ti: (bi, 0)),
            pl.BlockSpec((tb, hid), lambda bi, ti: (bi, 0)),
        ),
        compiler_params=pltpu.CompilerParams(
            dimension_semantics=("parallel", "arbitrary")),
    )(lengths2d, x_proj, w_hh_t, h0, c0)


def mixed_rnn_forward(x1, x2, x_lengths, hidden, params, *, time_chunk=4):
    """Eval-mode MixedRNN.forward (LSTM, mix_type='sum', pred_task='word').
    nn.Dropout layers are identity in eval mode."""
    # TODO(synk): training-mode dropout omitted (would need pltpu.prng_random_bits).
    h0, c0 = hidden
    s, b = x1.shape
    nlayers = h0.shape[0]
    hp = lambda a, w: jnp.dot(a, w, precision=lax.Precision.HIGHEST)

    # One-time wrapper-side parameter prep (tiny tables):
    #  * gate-column permutation [i,f,g,o] -> [i,f,o,g]
    #  * fold the g2w linear and the layer-0 input projection into the embedding
    #    tables: x_proj0 = (W_emb@W_ih0)[x1] + ((G_emb@W_g2w+b_g2w)@W_ih0)[x2] + b0
    w_ih_t = [_permute_gate_cols(w) for w in params["w_ih_t"]]
    w_hh_t = [_permute_gate_cols(w) for w in params["w_hh_t"]]
    b_gates = [_permute_gate_cols(bg) for bg in params["b_gates"]]

    g_lin_table = hp(params["g_table"], params["w_g2w_t"]) + params["b_g2w"]
    wp_table = hp(params["w_table"], w_ih_t[0])
    gp_table = hp(g_lin_table, w_ih_t[0])

    x_proj = embed_proj(x1.reshape(-1), x2.reshape(-1),
                        wp_table, gp_table, b_gates[0]).reshape(s, b, -1)

    h_n, c_n = [], []
    layer_out = None
    for l in range(nlayers):
        if l > 0:
            x_proj = matmul_bias(layer_out.reshape(s * b, -1),
                                 w_ih_t[l], b_gates[l]).reshape(s, b, -1)
        layer_out, h_last, c_last = lstm_layer(x_proj, w_hh_t[l], h0[l], c0[l],
                                               x_lengths, time_chunk=time_chunk)
        h_n.append(h_last)
        c_n.append(c_last)

    decoded = matmul_bias(layer_out.reshape(s * b, -1),
                          params["w_dec_t"], params["b_dec"]).reshape(s, b, -1)
    return decoded, (jnp.stack(h_n), jnp.stack(c_n))


# ---------------------------------------------------------------------------
# Pure-JAX reference (same math as the PyTorch module: embed -> g2w -> sum mix
# -> LSTM with packed-sequence masking -> decode)
# ---------------------------------------------------------------------------
def reference_forward(x1, x2, x_lengths, hidden, params):
    hp = lambda a, w: jnp.dot(a, w, precision=lax.Precision.HIGHEST)
    w_emb = params["w_table"][x1]
    g_emb = params["g_table"][x2]
    g_emb = hp(g_emb, params["w_g2w_t"]) + params["b_g2w"]
    mix = w_emb + g_emb
    h0, c0 = hidden
    s, b, _ = mix.shape
    nlayers = h0.shape[0]
    layer_in = mix
    h_n, c_n = [], []
    for l in range(nlayers):
        xproj = hp(layer_in, params["w_ih_t"][l]) + params["b_gates"][l]
        h, c = h0[l], c0[l]
        hid = h.shape[-1]
        outs = []
        for t in range(s):
            gates = xproj[t] + hp(h, params["w_hh_t"][l])
            i = jax.nn.sigmoid(gates[:, :hid])
            f = jax.nn.sigmoid(gates[:, hid:2 * hid])
            g = jnp.tanh(gates[:, 2 * hid:3 * hid])
            o = jax.nn.sigmoid(gates[:, 3 * hid:])
            c_new = f * c + i * g
            h_new = o * jnp.tanh(c_new)
            valid = (t < x_lengths)[:, None]
            h = jnp.where(valid, h_new, h)
            c = jnp.where(valid, c_new, c)
            outs.append(jnp.where(valid, h_new, 0.0))
        layer_in = jnp.stack(outs)
        h_n.append(h)
        c_n.append(c)
    decoded = hp(layer_in, params["w_dec_t"]) + params["b_dec"]
    return decoded, (jnp.stack(h_n), jnp.stack(c_n))


if __name__ == "__main__":
    S, B = 8, 2
    W_NTOKENS, G_NTOKENS = 50, 20
    W_EMSIZE, G_EMSIZE = 32, 16          # mix_type='sum' -> mix_emsize == w_emsize
    NHID, NLAYERS = 32, 2

    key = jax.random.PRNGKey(0)
    ks = jax.random.split(key, 16)

    x1 = jax.random.randint(ks[0], (S, B), 0, W_NTOKENS)
    x2 = jax.random.randint(ks[1], (S, B), 0, G_NTOKENS + 1)   # may hit padding_idx
    x_lengths = jnp.array([S, 5], dtype=jnp.int32)             # max length == S

    def unif(k, shape, scale=0.1):
        return jax.random.uniform(k, shape, jnp.float32, -scale, scale)

    g_table = unif(ks[3], (G_NTOKENS + 1, G_EMSIZE)).at[G_NTOKENS].set(0.0)  # padding row
    params = {
        "w_table": unif(ks[2], (W_NTOKENS, W_EMSIZE)),
        "g_table": g_table,
        "w_g2w_t": unif(ks[4], (G_EMSIZE, W_EMSIZE)),
        "b_g2w": unif(ks[5], (W_EMSIZE,)),
        "w_ih_t": [unif(ks[6], (W_EMSIZE, 4 * NHID)), unif(ks[7], (NHID, 4 * NHID))],
        "w_hh_t": [unif(ks[8], (NHID, 4 * NHID)), unif(ks[9], (NHID, 4 * NHID))],
        "b_gates": [unif(ks[10], (4 * NHID,)), unif(ks[11], (4 * NHID,))],
        "w_dec_t": unif(ks[12], (NHID, W_NTOKENS)),            # pred_task='word'
        "b_dec": jnp.zeros((W_NTOKENS,), jnp.float32),
    }

    h0 = jnp.zeros((NLAYERS, B, NHID), jnp.float32)            # init_hidden
    c0 = jnp.zeros((NLAYERS, B, NHID), jnp.float32)

    decoded, (h_n, c_n) = mixed_rnn_forward(x1, x2, x_lengths, (h0, c0), params,
                                            time_chunk=4)
    decoded = jax.block_until_ready(decoded)

    assert decoded.shape == (S, B, W_NTOKENS)
    assert h_n.shape == (NLAYERS, B, NHID) and c_n.shape == (NLAYERS, B, NHID)

    dec_ref, (h_exp, c_exp) = reference_forward(x1, x2, x_lengths, (h0, c0), params)
    assert jnp.allclose(decoded, dec_ref, atol=2e-3, rtol=2e-3)
    assert jnp.allclose(h_n, h_exp, atol=2e-3, rtol=2e-3)
    assert jnp.allclose(c_n, c_exp, atol=2e-3, rtol=2e-3)

    print("KERNEL_OK")
</pallas_src>

<mosaic_0001>
module attributes {stable_mosaic.version = 11 : i64} {
  func.func @_embed_proj_kernel(%arg0: i32, %arg1: memref<16x1xi32, #tpu.memory_space<vmem>>, %arg2: memref<16x1xi32, #tpu.memory_space<vmem>>, %arg3: memref<50x128xf32, #tpu.memory_space<vmem>>, %arg4: memref<21x128xf32, #tpu.memory_space<vmem>>, %arg5: memref<1x128xf32, #tpu.memory_space<vmem>>, %arg6: memref<16x128xf32, #tpu.memory_space<vmem>>) attributes {dimension_semantics = [#tpu.dimension_semantics<parallel>], iteration_bounds = array<i64: 1>, scalar_prefetch = 0 : i64, scratch_operands = 0 : i64, tpu.core_type = #tpu.core_type<tc>, window_params = [{transform_indices = @transform_0, window_bounds = array<i64: 16, 1>}, {transform_indices = @transform_1, window_bounds = array<i64: 16, 1>}, {pipeline_mode = #tpu.pipeline_mode<synchronous>, transform_indices = @transform_2, window_bounds = array<i64: 50, 128>}, {pipeline_mode = #tpu.pipeline_mode<synchronous>, transform_indices = @transform_3, window_bounds = array<i64: 21, 128>}, {pipeline_mode = #tpu.pipeline_mode<synchronous>, transform_indices = @transform_4, window_bounds = array<i64: 1, 128>}, {transform_indices = @transform_5, window_bounds = array<i64: 16, 128>}]} {
    %0 = tpu.iota {dimensions = array<i32: 1>} : vector<16x50xi32>
    %c0 = arith.constant 0 : index
    %c0_0 = arith.constant 0 : index
    %1 = vector.load %arg1[%c0, %c0_0] : memref<16x1xi32, #tpu.memory_space<vmem>>, vector<16x1xi32>
    %2 = vector.broadcast %1 : vector<16x1xi32> to vector<16x50xi32>
    %3 = arith.cmpi eq, %0, %2 : vector<16x50xi32>
    %4 = arith.extui %3 : vector<16x50xi1> to vector<16x50xi32>
    %5 = arith.sitofp %4 : vector<16x50xi32> to vector<16x50xf32>
    %6 = tpu.iota {dimensions = array<i32: 1>} : vector<16x21xi32>
    %c0_1 = arith.constant 0 : index
    %c0_2 = arith.constant 0 : index
    %7 = vector.load %arg2[%c0_1, %c0_2] : memref<16x1xi32, #tpu.memory_space<vmem>>, vector<16x1xi32>
    %8 = vector.broadcast %7 : vector<16x1xi32> to vector<16x21xi32>
    %9 = arith.cmpi eq, %6, %8 : vector<16x21xi32>
    %10 = arith.extui %9 : vector<16x21xi1> to vector<16x21xi32>
    %11 = arith.sitofp %10 : vector<16x21xi32> to vector<16x21xf32>
    %c0_3 = arith.constant 0 : index
    %c0_4 = arith.constant 0 : index
    %12 = vector.load %arg3[%c0_3, %c0_4] : memref<50x128xf32, #tpu.memory_space<vmem>>, vector<50x128xf32>
    %cst = arith.constant dense<0.000000e+00> : vector<16x128xf32>
    %13 = tpu.matmul %5, %12, %cst {dimension_numbers = #tpu.dot_dimension_numbers<[1], [0], [0], [1], [0, 0, 1, 1], [], []>} : vector<16x50xf32>, vector<50x128xf32>, vector<16x128xf32> -> vector<16x128xf32>
    %c0_5 = arith.constant 0 : index
    %c0_6 = arith.constant 0 : index
    %14 = vector.load %arg4[%c0_5, %c0_6] : memref<21x128xf32, #tpu.memory_space<vmem>>, vector<21x128xf32>
    %cst_7 = arith.constant dense<0.000000e+00> : vector<16x128xf32>
    %15 = tpu.matmul %11, %14, %cst_7 {dimension_numbers = #tpu.dot_dimension_numbers<[1], [0], [0], [1], [0, 0, 1, 1], [], []>} : vector<16x21xf32>, vector<21x128xf32>, vector<16x128xf32> -> vector<16x128xf32>
    %16 = arith.addf %13, %15 : vector<16x128xf32>
    %c0_8 = arith.constant 0 : index
    %c0_9 = arith.constant 0 : index
    %17 = vector.load %arg5[%c0_8, %c0_9] : memref<1x128xf32, #tpu.memory_space<vmem>>, vector<1x128xf32>
    %18 = vector.broadcast %17 : vector<1x128xf32> to vector<16x128xf32>
    %19 = arith.addf %16, %18 : vector<16x128xf32>
    %c0_10 = arith.constant 0 : index
    %c0_11 = arith.constant 0 : index
    %20 = vector.load %arg6[%c0_10, %c0_11] : memref<16x128xf32, #tpu.memory_space<vmem>>, vector<16x128xf32>
    tpu.vector_store %arg6[%c0_10, %c0_11], %19 {strides = array<i32>} : memref<16x128xf32, #tpu.memory_space<vmem>>, vector<16x128xf32>,
    return
  }
  func.func @transform_0(%arg0: i32) -> (i32, i32) {
    %c0_i32 = arith.constant 0 : i32
    %c0_i32_0 = arith.constant 0 : i32
    return %arg0, %c0_i32 : i32, i32
  }
  func.func @transform_1(%arg0: i32) -> (i32, i32) {
    %c0_i32 = arith.constant 0 : i32
    %c0_i32_0 = arith.constant 0 : i32
    return %arg0, %c0_i32 : i32, i32
  }
  func.func @transform_2(%arg0: i32) -> (i32, i32) {
    %c0_i32 = arith.constant 0 : i32
    %c0_i32_0 = arith.constant 0 : i32
    %c0_i32_1 = arith.constant 0 : i32
    return %c0_i32, %c0_i32_0 : i32, i32
  }
  func.func @transform_3(%arg0: i32) -> (i32, i32) {
    %c0_i32 = arith.constant 0 : i32
    %c0_i32_0 = arith.constant 0 : i32
    %c0_i32_1 = arith.constant 0 : i32
    return %c0_i32, %c0_i32_0 : i32, i32
  }
  func.func @transform_4(%arg0: i32) -> (i32, i32) {
    %c0_i32 = arith.constant 0 : i32
    %c0_i32_0 = arith.constant 0 : i32
    %c0_i32_1 = arith.constant 0 : i32
    return %c0_i32, %c0_i32_0 : i32, i32
  }
  func.func @transform_5(%arg0: i32) -> (i32, i32) {
    %c0_i32 = arith.constant 0 : i32
    %c0_i32_0 = arith.constant 0 : i32
    return %arg0, %c0_i32 : i32, i32
  }
}

</mosaic_0001>

<llo_original>
// kernel: tpu_custom_call.1
$region0: #{tpu_custom_call.1}
  #allocation0 [shape = 'u32[]', space=smem, size = 0x4, offset = 0x4, fixed_abs, tag = 'smem constant byte address 0x4 - core index']
  #allocation1 [shape = 'u32[144,128]{1,0:T(1,128)}', space=vmem, size = 0x12000, scoped, tag = 'internal scratch']
  %s0 = inlined_call_operand.vmem [shape: s32[16,1], index: 0, kind: input, shape index: {}]
  %s1 = inlined_call_operand.vmem [shape: s32[16,1], index: 1, kind: input, shape index: {}]
  %s2 = inlined_call_operand.hbm [shape: f32[50,128], index: 2, kind: input, shape index: {}]
  %s3 = inlined_call_operand.vmem [shape: f32[21,128], index: 3, kind: input, shape index: {}]
  %s4 = inlined_call_operand.vmem [shape: f32[1,128], index: 4, kind: input, shape index: {}]
  %s5 = inlined_call_operand.hbm [shape: f32[16,128], index: 5, kind: output, shape index: {}]
  %s6 = sld [smem:[#allocation0]]
  $region34: #{tpu_custom_call.1} parent=0
    _
  %s8 = ssub.s32 1, %s6
  %s9 = scalar_select 0, %s8, %s6
  $region1: #{tpu_custom_call.1} parent=0
    #allocation2 [shape = 'u8[28672]{0}', space=vmem, size = 0x7000, scoped, tag = 'input window, operand 2, single buffered']
    #allocation3 [shape = 's32[1]{0}', space=sflag, size = 0x4, scoped, tag = 'scoped memory for tpu_custom_call.1']
    #allocation4 [shape = 's32[1]{0}', space=sflag, size = 0x4, scoped, tag = 'scoped memory for tpu_custom_call.1']
    #allocation5 [shape = 'u8[8192]{0}', space=vmem, size = 0x2000, scoped, tag = 'output window, operand 0, single buffered']
    %10 = vsyncpa [#allocation3], 0
    %11 = vsyncpa [#allocation4], 0
    // Predicated region
    $region2: #{tpu_custom_call.1} parent=1 // pred_check
      _
    $region3: #{tpu_custom_call.1} parent=1 // pred_check_branch
      %13 = sbr.rel (0) target = $region5
    $region4: #{tpu_custom_call.1} parent=1 // pred_region
      _
    $region5: #{tpu_custom_call.1} parent=1 // pred_fallthru
      _
    // Predicated region
    $region6: #{tpu_custom_call.1} parent=1 // pred_check
      _
    $region7: #{tpu_custom_call.1} parent=1 // pred_check_branch
      %15 = sbr.rel (0) target = $region9
    $region8: #{tpu_custom_call.1} parent=1 // pred_region
      _
    $region9: #{tpu_custom_call.1} parent=1 // pred_fallthru
      _
    // Predicated region
    $region10: #{tpu_custom_call.1} parent=1 // pred_check
      _
    $region11: #{tpu_custom_call.1} parent=1 // pred_check_branch
      %17 = sbr.rel (0) target = $region13
    $region12: #{tpu_custom_call.1} parent=1 // pred_region
      %s19 = ssub.s32 896, 896
      %20 = vsyncadd [#allocation3], %s19
      %s21 = sshll.u32 [#allocation2], 4
      %s22 = int_to_ptr.vmem [resolvable:$true] %s21
      %27 = dma.hbm_to_vmem [thread:$0]  %s2, 896, %s22, [#allocation3], 128, 128, 8
    $region13: #{tpu_custom_call.1} parent=1 // pred_fallthru
      _
    // Predicated region
    $region14: #{tpu_custom_call.1} parent=1 // pred_check
      _
    $region15: #{tpu_custom_call.1} parent=1 // pred_check_branch
      %29 = sbr.rel (0) target = $region17
    $region16: #{tpu_custom_call.1} parent=1 // pred_region
      _
    $region17: #{tpu_custom_call.1} parent=1 // pred_fallthru
      _
    // Predicated region
    $region18: #{tpu_custom_call.1} parent=1 // pred_check
      _
    $region19: #{tpu_custom_call.1} parent=1 // pred_check_branch
      %31 = sbr.rel (0) target = $region21
    $region20: #{tpu_custom_call.1} parent=1 // pred_region
      _
    $region21: #{tpu_custom_call.1} parent=1 // pred_fallthru
      _
    // Predicated region
    $region22: #{tpu_custom_call.1} parent=1 // pred_check
      _
    $region23: #{tpu_custom_call.1} parent=1 // pred_check_branch
      %33 = sbr.rel (0) target = $region25
    $region24: #{tpu_custom_call.1} parent=1 // pred_region
      %34 = dma.done [#allocation3], 896
    $region25: #{tpu_custom_call.1} parent=1 // pred_fallthru
      _
    %v35 = vlaneseq
    %v36 = vand.u32 %v35, 127
    %v37 = vld [vmem:[%s0] sm:$0xff]
    %v38 = vld [vmem:[%s0 + $0x8] sm:$0xff]
    %39 = vset.pattern.permute.xlu0 0
    %40 = vperm.xlu0 %39, %v37
    %v41 = vpop.permute.xlu0 %40
    %42 = vset.pattern.permute.xlu0 0
    %43 = vperm.xlu0 %42, %v38
    %v44 = vpop.permute.xlu0 %43
    %vm45 = vcmp.eq.s32.totalorder %v36, %v41
    %vm46 = vcmp.eq.s32.totalorder %v36, %v44
    %v47 = vsel %vm45, 1, 0
    %v48 = vsel %vm46, 1, 0
    %v49 = vcvt.s32.f32 %v47
    %v50 = vcvt.s32.f32 %v48
    %v51 = vld [vmem:[%s1] sm:$0xff]
    %v52 = vld [vmem:[%s1 + $0x8] sm:$0xff]
    %53 = vset.pattern.permute.xlu0 0
    %54 = vperm.xlu0 %53, %v51
    %v55 = vpop.permute.xlu0 %54
    %56 = vset.pattern.permute.xlu0 0
    %57 = vperm.xlu0 %56, %v52
    %v58 = vpop.permute.xlu0 %57
    %vm59 = vcmp.eq.s32.totalorder %v36, %v55
    %vm60 = vcmp.eq.s32.totalorder %v36, %v58
    %v61 = vsel %vm59, 1, 0
    %v62 = vsel %vm60, 1, 0
    %v63 = vcvt.s32.f32 %v61
    %v64 = vcvt.s32.f32 %v62
    %v65 = vld [vmem:[#allocation2] sm:$0xff]
    %v66 = vld [vmem:[#allocation2 + $0x8] sm:$0xff]
    %v67 = vld [vmem:[#allocation2 + $0x10] sm:$0xff]
    %v68 = vld [vmem:[#allocation2 + $0x18] sm:$0xff]
    %v69 = vld [vmem:[#allocation2 + $0x20] sm:$0xff]
    %v70 = vld [vmem:[#allocation2 + $0x28] sm:$0xff]
    %v71 = vld [vmem:[#allocation2 + $0x30] sm:$0x3]
    %v72 = vld [vmem:[%s3] sm:$0xff]
    %v73 = vld [vmem:[%s3 + $0x8] sm:$0xff]
    %v74 = vld [vmem:[%s3 + $0x10] sm:$0x1f]
    %vm75 = vcmask 171008
    %v77 = vsel %vm75, %v63, 0
    %v80 = vsel %vm75, %v64, 0
    %vm82 = vcmask 1044480
    %v84 = vsel %vm82, %v74, 0
    %86 = vmatprep.subr.mxu0 0.0
    %87 = vmatpush1.msra.mxu0 0.0
    %88 = vmatprep.subr.mxu0 0.0
    %89 = vmatpush1.msra.mxu0 0.0
    %90 = vmatprep.subr.mxu0 0.0
    %91 = vmatpush1.msra.mxu0 0.0
    %92 = vmatprep.subr.mxu0 0.0
    %93 = vmatpush1.msra.mxu0 0.0
    %94 = vmatprep.subr.mxu0 0.0
    %95 = vmatpush1.msra.mxu0 0.0
    %96 = vmatprep.subr.mxu0 0.0
    %97 = vmatpush1.msra.mxu0 0.0
    %98 = vmatprep.subr.mxu0 0.0
    %99 = vmatpush1.msra.mxu0 0.0
    %100 = vmatprep.subr.mxu0 0.0
    %101 = vmatpush1.msra.mxu0 0.0
    %102 = vmatprep.subr.mxu0 0.0
    %103 = vmatpush1.msra.mxu0 0.0
    %104 = vmatprep.subr.mxu0 0.0
    %105 = vmatpush1.msra.mxu0 0.0
    %106 = vmatprep.subr.mxu0 0.0
    %107 = vmatpush1.msra.mxu0 0.0
    %108 = vmatprep.subr.mxu0 0.0
    %109 = vmatpush1.msra.mxu0 0.0
    %110 = vmatprep.subr.mxu0 0.0
    %111 = vmatpush1.msra.mxu0 0.0
    %112 = vmatprep.subr.mxu0 0.0
    %113 = vmatpush1.msra.mxu0 %v84
    %114 = vmatprep.subr.mxu0 0.0
    %115 = vmatpush1.msra.mxu0 %v73
    %116 = vmatprep.subr.mxu0 0.0
    %117 = vmatpush1.msra.mxu0 %v72
    %118 = vmatprep.subr.mxu0 0.0
    %119 = vmatpush2.msra.mxu0 0.0
    %120 = vmatprep.subr.mxu0 0.0
    %121 = vmatpush2.msra.mxu0 0.0
    %122 = vmatprep.subr.mxu0 0.0
    %123 = vmatpush2.msra.mxu0 0.0
    %124 = vmatprep.subr.mxu0 0.0
    %125 = vmatpush2.msra.mxu0 0.0
    %126 = vmatprep.subr.mxu0 0.0
    %127 = vmatpush2.msra.mxu0 0.0
    %128 = vmatprep.subr.mxu0 0.0
    %129 = vmatpush2.msra.mxu0 0.0
    %130 = vmatprep.subr.mxu0 0.0
    %131 = vmatpush2.msra.mxu0 0.0
    %132 = vmatprep.subr.mxu0 0.0
    %133 = vmatpush2.msra.mxu0 0.0
    %134 = vmatprep.subr.mxu0 0.0
    %135 = vmatpush2.msra.mxu0 0.0
    %136 = vmatprep.subr.mxu0 0.0
    %137 = vmatpush2.msra.mxu0 0.0
    %138 = vmatprep.subr.mxu0 0.0
    %139 = vmatpush2.msra.mxu0 0.0
    %140 = vmatprep.subr.mxu0 0.0
    %141 = vmatpush2.msra.mxu0 0.0
    %142 = vmatprep.subr.mxu0 0.0
    %143 = vmatpush2.msra.mxu0 0.0
    %144 = vmatprep.subr.mxu0 0.0
    %145 = vmatpush2.msra.mxu0 0.0
    %146 = vmatprep.subr.mxu0 0.0
    %147 = vmatpush2.msra.mxu0 0.0
    %148 = vmatprep.subr.mxu0 0.0
    %149 = vmatpush2.msra.mxu0 0.0
    %150 = vmatprep.mubr.f32.mxu0 0.0
    %151 = vmatmul.mubr.f32.gmra.mxu0 %v77
    %v152 = vpop.f32.mrf.mxu0
    %v153 = vadd.f32 0.0, %v152
    %v154 = vpop.f32.mrf.mxu0
    %155 = vmatprep.mubr.f32.mxu0 0.0
    %156 = vmatmul.mubr.f32.gmra.mxu0 %v80
    %v157 = vpop.f32.mrf.mxu0
    %v158 = vadd.f32 0.0, %v157
    %v159 = vpop.f32.mrf.mxu0
    %160 = vdwg.mxu0
    %vm161 = vcmask 408576
    %v163 = vsel %vm161, %v49, 0
    %v166 = vsel %vm161, %v50, 0
    %vm168 = vcmask 1041408
    %v170 = vsel %vm168, %v71, 0
    %172 = vmatprep.subr.mxu0 0.0
    %173 = vmatpush1.msra.mxu0 0.0
    %174 = vmatprep.subr.mxu0 0.0
    %175 = vmatpush1.msra.mxu0 0.0
    %176 = vmatprep.subr.mxu0 0.0
    %177 = vmatpush1.msra.mxu0 0.0
    %178 = vmatprep.subr.mxu0 0.0
    %179 = vmatpush1.msra.mxu0 0.0
    %180 = vmatprep.subr.mxu0 0.0
    %181 = vmatpush1.msra.mxu0 0.0
    %182 = vmatprep.subr.mxu0 0.0
    %183 = vmatpush1.msra.mxu0 0.0
    %184 = vmatprep.subr.mxu0 0.0
    %185 = vmatpush1.msra.mxu0 0.0
    %186 = vmatprep.subr.mxu0 0.0
    %187 = vmatpush1.msra.mxu0 0.0
    %188 = vmatprep.subr.mxu0 0.0
    %189 = vmatpush1.msra.mxu0 0.0
    %190 = vmatprep.subr.mxu0 0.0
    %191 = vmatpush1.msra.mxu0 %v170
    %192 = vmatprep.subr.mxu0 0.0
    %193 = vmatpush1.msra.mxu0 %v70
    %194 = vmatprep.subr.mxu0 0.0
    %195 = vmatpush1.msra.mxu0 %v69
    %196 = vmatprep.subr.mxu0 0.0
    %197 = vmatpush1.msra.mxu0 %v68
    %198 = vmatprep.subr.mxu0 0.0
    %199 = vmatpush1.msra.mxu0 %v67
    %200 = vmatprep.subr.mxu0 0.0
    %201 = vmatpush1.msra.mxu0 %v66
    %202 = vmatprep.subr.mxu0 0.0
    %203 = vmatpush1.msra.mxu0 %v65
    %204 = vmatprep.subr.mxu0 0.0
    %205 = vmatpush2.msra.mxu0 0.0
    %206 = vmatprep.subr.mxu0 0.0
    %207 = vmatpush2.msra.mxu0 0.0
    %208 = vmatprep.subr.mxu0 0.0
    %209 = vmatpush2.msra.mxu0 0.0
    %210 = vmatprep.subr.mxu0 0.0
    %211 = vmatpush2.msra.mxu0 0.0
    %212 = vmatprep.subr.mxu0 0.0
    %213 = vmatpush2.msra.mxu0 0.0
    %214 = vmatprep.subr.mxu0 0.0
    %215 = vmatpush2.msra.mxu0 0.0
    %216 = vmatprep.subr.mxu0 0.0
    %217 = vmatpush2.msra.mxu0 0.0
    %218 = vmatprep.subr.mxu0 0.0
    %219 = vmatpush2.msra.mxu0 0.0
    %220 = vmatprep.subr.mxu0 0.0
    %221 = vmatpush2.msra.mxu0 0.0
    %222 = vmatprep.subr.mxu0 0.0
    %223 = vmatpush2.msra.mxu0 0.0
    %224 = vmatprep.subr.mxu0 0.0
    %225 = vmatpush2.msra.mxu0 0.0
    %226 = vmatprep.subr.mxu0 0.0
    %227 = vmatpush2.msra.mxu0 0.0
    %228 = vmatprep.subr.mxu0 0.0
    %229 = vmatpush2.msra.mxu0 0.0
    %230 = vmatprep.subr.mxu0 0.0
    %231 = vmatpush2.msra.mxu0 0.0
    %232 = vmatprep.subr.mxu0 0.0
    %233 = vmatpush2.msra.mxu0 0.0
    %234 = vmatprep.subr.mxu0 0.0
    %235 = vmatpush2.msra.mxu0 0.0
    %236 = vmatprep.mubr.f32.mxu0 0.0
    %237 = vmatmul.mubr.f32.gmra.mxu0 %v163
    %v238 = vpop.f32.mrf.mxu0
    %v239 = vadd.f32 %v153, %v238
    %v240 = vpop.f32.mrf.mxu0
    %241 = vmatprep.mubr.f32.mxu0 0.0
    %242 = vmatmul.mubr.f32.gmra.mxu0 %v166
    %v243 = vpop.f32.mrf.mxu0
    %v244 = vadd.f32 %v158, %v243
    %v245 = vpop.f32.mrf.mxu0
    %246 = vdwg.mxu0
    %v247 = vld [vmem:[%s4] sm:$0x1]
    %v249 = vlaneseq
    %v250 = vshrl.u32 %v249, 7
    %v251 = vsub.s32 0, %v250
    %v252 = vrot.slane %v247, %v251
    %v254 = vadd.f32 %v239, %v252
    %v255 = vadd.f32 %v244, %v252
    %256 = vst [vmem:[#allocation5] sm:$0xff] %v254
    %257 = vst [vmem:[#allocation5 + $0x8] sm:$0xff] %v255
    // Predicated region
    $region26: #{tpu_custom_call.1} parent=1 // pred_check
      _
    $region27: #{tpu_custom_call.1} parent=1 // pred_check_branch
      %259 = sbr.rel (0) target = $region29
    $region28: #{tpu_custom_call.1} parent=1 // pred_region
      %s261 = ssub.s32 256, 256
      %262 = vsyncadd [#allocation4], %s261
      %s263 = sshll.u32 [#allocation5], 4
      %s264 = int_to_ptr.vmem [resolvable:$true] %s263
      %269 = dma.vmem_to_hbm [thread:$0]  %s264, 256, %s5, [#allocation4], 128, 128, 8
    $region29: #{tpu_custom_call.1} parent=1 // pred_fallthru
      _
    // Predicated region
    $region30: #{tpu_custom_call.1} parent=1 // pred_check
      _
    $region31: #{tpu_custom_call.1} parent=1 // pred_check_branch
      %271 = sbr.rel (0) target = $region33
    $region32: #{tpu_custom_call.1} parent=1 // pred_region
      %272 = dma.done [#allocation4], 256
    $region33: #{tpu_custom_call.1} parent=1 // pred_fallthru
      _
    %273 = vsyncpa [#allocation3], 1
    %274 = vsyncpa [#allocation4], 1

</llo_original>
